<compile_context>
chip_gen: v5e
topology: v5e:2x2
jax: 0.10.0
libtpu: 0.0.40
codegen_flags: <defaults>
</compile_context>

<pallas_src>
import functools

import jax
import jax.numpy as jnp
from jax.experimental import pallas as pl
from jax.experimental.pallas import tpu as pltpu


# ---------------------------------------------------------------------------
# Single-step kernel (exactly the PyTorch module's forward).
# ---------------------------------------------------------------------------
def _lsthm_step_kernel(x_ref, h_ref, z_ref, c_ref,
                       wt_ref, ut_ref, vt_ref, b_ref,
                       c_out_ref, h_out_ref, *, cell_size):
    cd = wt_ref.dtype  # bf16 compute dtype for the MXU
    # Three accumulating MXU matmuls (f32 accumulation) + f32 bias on the VPU.
    sums = (jnp.dot(x_ref[...].astype(cd), wt_ref[...],
                    preferred_element_type=jnp.float32)
            + jnp.dot(h_ref[...].astype(cd), ut_ref[...],
                      preferred_element_type=jnp.float32)
            + jnp.dot(z_ref[...].astype(cd), vt_ref[...],
                      preferred_element_type=jnp.float32)
            + b_ref[...])

    C = cell_size
    f_t = jax.nn.sigmoid(sums[:, 0 * C:1 * C])
    i_t = jax.nn.sigmoid(sums[:, 1 * C:2 * C])
    o_t = jax.nn.sigmoid(sums[:, 2 * C:3 * C])
    ch_t = jnp.tanh(sums[:, 3 * C:4 * C])

    c_t = f_t * c_ref[...] + i_t * ch_t
    h_t = jnp.tanh(c_t) * o_t

    c_out_ref[...] = c_t
    h_out_ref[...] = h_t


# ---------------------------------------------------------------------------
# Sequence kernel: recurrence hoisted into the grid, weights VMEM-resident.
# ---------------------------------------------------------------------------
def _lsthm_seq_kernel(x_ref, z_ref, wt_ref, ut_ref, vt_ref, b_ref,
                      c0_ref, h0_ref,
                      hseq_ref, cfin_ref, hfin_ref,
                      c_sc, h_sc, *, cell_size):
    t = pl.program_id(0)

    @pl.when(t == 0)
    def _():
        c_sc[...] = c0_ref[...]
        h_sc[...] = h0_ref[...]

    cd = wt_ref.dtype
    x_t = x_ref[0]                       # (B, in)  bf16, streamed per step
    z_t = z_ref[0]                       # (B, hyb) bf16, streamed per step
    h_tm = h_sc[...].astype(cd)          # recurrent state, cast for the MXU

    sums = (jnp.dot(x_t, wt_ref[...], preferred_element_type=jnp.float32)
            + jnp.dot(h_tm, ut_ref[...], preferred_element_type=jnp.float32)
            + jnp.dot(z_t, vt_ref[...], preferred_element_type=jnp.float32)
            + b_ref[...])

    C = cell_size
    f_t = jax.nn.sigmoid(sums[:, 0 * C:1 * C])
    i_t = jax.nn.sigmoid(sums[:, 1 * C:2 * C])
    o_t = jax.nn.sigmoid(sums[:, 2 * C:3 * C])
    ch_t = jnp.tanh(sums[:, 3 * C:4 * C])

    c_t = f_t * c_sc[...] + i_t * ch_t
    h_t = jnp.tanh(c_t) * o_t

    c_sc[...] = c_t
    h_sc[...] = h_t
    hseq_ref[0] = h_t.astype(hseq_ref.dtype)   # bf16 history writeback

    @pl.when(t == pl.num_programs(0) - 1)
    def _():
        cfin_ref[...] = c_t
        hfin_ref[...] = h_t


# ---------------------------------------------------------------------------
# Parameter packing (one-time): bf16 weights, f32 pre-summed bias.
# ---------------------------------------------------------------------------
def pack_lsthm_params(params, compute_dtype=jnp.bfloat16):
    wt = params["Wt"].astype(compute_dtype)
    ut = params["Ut"].astype(compute_dtype)
    vt = params["Vt"].astype(compute_dtype)
    bias = (params["b_w"] + params["b_u"] + params["b_v"]
            ).reshape(1, -1).astype(jnp.float32)
    return wt, ut, vt, bias


# ---------------------------------------------------------------------------
# Wrappers
# ---------------------------------------------------------------------------
def lsthm_forward(x, ctm, htm, ztm, packed):
    """Single fused LSTHM cell step (matches the PyTorch forward)."""
    wt, ut, vt, bias = packed
    B, C = ctm.shape
    kernel = functools.partial(_lsthm_step_kernel, cell_size=C)
    vmem = pl.BlockSpec(memory_space=pltpu.VMEM)
    c_t, h_t = pl.pallas_call(
        kernel,
        out_shape=(jax.ShapeDtypeStruct((B, C), jnp.float32),
                   jax.ShapeDtypeStruct((B, C), jnp.float32)),
        in_specs=[vmem] * 8,
        out_specs=(vmem, vmem),
    )(x, htm, ztm, ctm, wt, ut, vt, bias)
    return c_t, h_t


def lsthm_sequence(x_seq, z_seq, c0, h0, packed):
    """Time-looped LSTHM: grid over T, weights resident, state in VMEM scratch.

    Returns (h_history[T, B, C] bf16, c_T f32, h_T f32).
    """
    wt, ut, vt, bias = packed
    T, B, in_size = x_seq.shape
    hyb = z_seq.shape[2]
    C = c0.shape[1]

    # One-time cast of the streamed activations (halves per-step DMA traffic).
    x_seq = x_seq.astype(wt.dtype)
    z_seq = z_seq.astype(wt.dtype)

    kernel = functools.partial(_lsthm_seq_kernel, cell_size=C)

    in_specs = [
        pl.BlockSpec((1, B, in_size), lambda t: (t, 0, 0)),   # x_t streamed
        pl.BlockSpec((1, B, hyb), lambda t: (t, 0, 0)),       # z_t streamed
        pl.BlockSpec(wt.shape, lambda t: (0, 0)),             # resident weight
        pl.BlockSpec(ut.shape, lambda t: (0, 0)),             # resident weight
        pl.BlockSpec(vt.shape, lambda t: (0, 0)),             # resident weight
        pl.BlockSpec(bias.shape, lambda t: (0, 0)),           # resident bias
        pl.BlockSpec(c0.shape, lambda t: (0, 0)),             # initial state
        pl.BlockSpec(h0.shape, lambda t: (0, 0)),             # initial state
    ]
    out_specs = (
        pl.BlockSpec((1, B, C), lambda t: (t, 0, 0)),         # h history
        pl.BlockSpec((B, C), lambda t: (0, 0)),               # final c
        pl.BlockSpec((B, C), lambda t: (0, 0)),               # final h
    )

    h_seq, c_T, h_T = pl.pallas_call(
        kernel,
        grid=(T,),
        out_shape=(jax.ShapeDtypeStruct((T, B, C), jnp.bfloat16),
                   jax.ShapeDtypeStruct((B, C), jnp.float32),
                   jax.ShapeDtypeStruct((B, C), jnp.float32)),
        in_specs=in_specs,
        out_specs=out_specs,
        scratch_shapes=[pltpu.VMEM((B, C), jnp.float32),      # c carry
                        pltpu.VMEM((B, C), jnp.float32)],     # h carry
        compiler_params=pltpu.CompilerParams(
            dimension_semantics=("arbitrary",)),              # recurrent axis
    )(x_seq, z_seq, wt, ut, vt, bias, c0, h0)
    return h_seq, c_T, h_T


# ---------------------------------------------------------------------------
# Pure-JAX f32 references (mirror the PyTorch forward).
# ---------------------------------------------------------------------------
def lsthm_reference(x, ctm, htm, ztm, params):
    C = ctm.shape[1]
    sums = (x @ params["Wt"] + params["b_w"]
            + htm @ params["Ut"] + params["b_u"]
            + ztm @ params["Vt"] + params["b_v"])
    f_t = jax.nn.sigmoid(sums[:, :C])
    i_t = jax.nn.sigmoid(sums[:, C:2 * C])
    o_t = jax.nn.sigmoid(sums[:, 2 * C:3 * C])
    ch_t = jnp.tanh(sums[:, 3 * C:])
    c_t = f_t * ctm + i_t * ch_t
    h_t = jnp.tanh(c_t) * o_t
    return c_t, h_t


def lsthm_sequence_reference(x_seq, z_seq, c0, h0, params):
    c, h = c0, h0
    hs = []
    for t in range(x_seq.shape[0]):
        c, h = lsthm_reference(x_seq[t], c, h, z_seq[t], params)
        hs.append(h)
    return jnp.stack(hs), c, h


if __name__ == "__main__":
    # Small deterministic shapes; B=16 fills the bf16 sublane tile, C=128 keeps
    # every gate slice lane-aligned.
    B = 16
    cell_size = 128
    in_size = 64
    hybrid_in_size = 32
    T = 8

    key = jax.random.PRNGKey(0)
    ks = jax.random.split(key, 12)

    def linear_params(k, fan_in, fan_out):
        kw, kb = jax.random.split(k)
        bound = 1.0 / jnp.sqrt(fan_in)
        # stored transposed: [fan_in, fan_out] so the kernel does x @ W
        w = jax.random.uniform(kw, (fan_in, fan_out), jnp.float32, -bound, bound)
        b = jax.random.uniform(kb, (fan_out,), jnp.float32, -bound, bound)
        return w, b

    Wt, b_w = linear_params(ks[0], in_size, 4 * cell_size)
    Ut, b_u = linear_params(ks[1], cell_size, 4 * cell_size)
    Vt, b_v = linear_params(ks[2], hybrid_in_size, 4 * cell_size)
    params = dict(Wt=Wt, Ut=Ut, Vt=Vt, b_w=b_w, b_u=b_u, b_v=b_v)

    x = jax.random.normal(ks[3], (B, in_size), jnp.float32)
    ctm = jax.random.normal(ks[4], (B, cell_size), jnp.float32)
    htm = jax.random.normal(ks[5], (B, cell_size), jnp.float32)
    ztm = jax.random.normal(ks[6], (B, hybrid_in_size), jnp.float32)

    x_seq = jax.random.normal(ks[7], (T, B, in_size), jnp.float32)
    z_seq = jax.random.normal(ks[8], (T, B, hybrid_in_size), jnp.float32)
    c0 = jax.random.normal(ks[9], (B, cell_size), jnp.float32)
    h0 = jax.random.normal(ks[10], (B, cell_size), jnp.float32)

    packed = pack_lsthm_params(params)

    # --- single-step (module forward semantics) --------------------------
    step_fn = jax.jit(lsthm_forward)
    c_t, h_t = jax.block_until_ready(step_fn(x, ctm, htm, ztm, packed))

    c_ref, h_ref = lsthm_reference(x, ctm, htm, ztm, params)
    # Tolerances reflect bf16 MXU inputs (f32 accumulate, f32 bias & gate math).
    assert jnp.allclose(c_t, c_ref, atol=4e-2, rtol=4e-2), \
        float(jnp.max(jnp.abs(c_t - c_ref)))
    assert jnp.allclose(h_t, h_ref, atol=4e-2, rtol=4e-2), \
        float(jnp.max(jnp.abs(h_t - h_ref)))

    # --- time-looped kernel (weights VMEM-resident, state carried) -------
    seq_fn = jax.jit(lsthm_sequence)
    h_seq, c_T, h_T = jax.block_until_ready(
        seq_fn(x_seq, z_seq, c0, h0, packed))

    h_seq_ref, c_T_ref, h_T_ref = lsthm_sequence_reference(
        x_seq, z_seq, c0, h0, params)
    assert jnp.allclose(h_seq.astype(jnp.float32), h_seq_ref,
                        atol=8e-2, rtol=8e-2), \
        float(jnp.max(jnp.abs(h_seq.astype(jnp.float32) - h_seq_ref)))
    assert jnp.allclose(c_T, c_T_ref, atol=8e-2, rtol=8e-2), \
        float(jnp.max(jnp.abs(c_T - c_T_ref)))
    assert jnp.allclose(h_T, h_T_ref, atol=8e-2, rtol=8e-2), \
        float(jnp.max(jnp.abs(h_T - h_T_ref)))

    print("KERNEL_OK")
</pallas_src>

<mosaic_0001>
module attributes {stable_mosaic.version = 11 : i64} {
  func.func @_lsthm_step_kernel(%arg0: memref<16x64xf32, #tpu.memory_space<vmem>>, %arg1: memref<16x128xf32, #tpu.memory_space<vmem>>, %arg2: memref<16x32xf32, #tpu.memory_space<vmem>>, %arg3: memref<16x128xf32, #tpu.memory_space<vmem>>, %arg4: memref<64x512xbf16, #tpu.memory_space<vmem>>, %arg5: memref<128x512xbf16, #tpu.memory_space<vmem>>, %arg6: memref<32x512xbf16, #tpu.memory_space<vmem>>, %arg7: memref<1x512xf32, #tpu.memory_space<vmem>>, %arg8: memref<16x128xf32, #tpu.memory_space<vmem>>, %arg9: memref<16x128xf32, #tpu.memory_space<vmem>>) attributes {dimension_semantics = [], scalar_prefetch = 0 : i64, scratch_operands = 0 : i64, tpu.core_type = #tpu.core_type<tc>} {
    %c0 = arith.constant 0 : index
    %c0_0 = arith.constant 0 : index
    %0 = vector.load %arg0[%c0, %c0_0] : memref<16x64xf32, #tpu.memory_space<vmem>>, vector<16x64xf32>
    %1 = arith.truncf %0 : vector<16x64xf32> to vector<16x64xbf16>
    %c0_1 = arith.constant 0 : index
    %c0_2 = arith.constant 0 : index
    %2 = vector.load %arg4[%c0_1, %c0_2] : memref<64x512xbf16, #tpu.memory_space<vmem>>, vector<64x512xbf16>
    %cst = arith.constant dense<0.000000e+00> : vector<16x512xf32>
    %3 = tpu.matmul %1, %2, %cst {dimension_numbers = #tpu.dot_dimension_numbers<[1], [0], [0], [1], [0, 0, 1, 1], [], []>} : vector<16x64xbf16>, vector<64x512xbf16>, vector<16x512xf32> -> vector<16x512xf32>
    %c0_3 = arith.constant 0 : index
    %c0_4 = arith.constant 0 : index
    %4 = vector.load %arg1[%c0_3, %c0_4] : memref<16x128xf32, #tpu.memory_space<vmem>>, vector<16x128xf32>
    %5 = arith.truncf %4 : vector<16x128xf32> to vector<16x128xbf16>
    %c0_5 = arith.constant 0 : index
    %c0_6 = arith.constant 0 : index
    %6 = vector.load %arg5[%c0_5, %c0_6] : memref<128x512xbf16, #tpu.memory_space<vmem>>, vector<128x512xbf16>
    %cst_7 = arith.constant dense<0.000000e+00> : vector<16x512xf32>
    %7 = tpu.matmul %5, %6, %cst_7 {dimension_numbers = #tpu.dot_dimension_numbers<[1], [0], [0], [1], [0, 0, 1, 1], [], []>} : vector<16x128xbf16>, vector<128x512xbf16>, vector<16x512xf32> -> vector<16x512xf32>
    %8 = arith.addf %3, %7 : vector<16x512xf32>
    %c0_8 = arith.constant 0 : index
    %c0_9 = arith.constant 0 : index
    %9 = vector.load %arg2[%c0_8, %c0_9] : memref<16x32xf32, #tpu.memory_space<vmem>>, vector<16x32xf32>
    %10 = arith.truncf %9 : vector<16x32xf32> to vector<16x32xbf16>
    %c0_10 = arith.constant 0 : index
    %c0_11 = arith.constant 0 : index
    %11 = vector.load %arg6[%c0_10, %c0_11] : memref<32x512xbf16, #tpu.memory_space<vmem>>, vector<32x512xbf16>
    %cst_12 = arith.constant dense<0.000000e+00> : vector<16x512xf32>
    %12 = tpu.matmul %10, %11, %cst_12 {dimension_numbers = #tpu.dot_dimension_numbers<[1], [0], [0], [1], [0, 0, 1, 1], [], []>} : vector<16x32xbf16>, vector<32x512xbf16>, vector<16x512xf32> -> vector<16x512xf32>
    %13 = arith.addf %8, %12 : vector<16x512xf32>
    %c0_13 = arith.constant 0 : index
    %c0_14 = arith.constant 0 : index
    %14 = vector.load %arg7[%c0_13, %c0_14] : memref<1x512xf32, #tpu.memory_space<vmem>>, vector<1x512xf32>
    %15 = vector.broadcast %14 : vector<1x512xf32> to vector<16x512xf32>
    %16 = arith.addf %13, %15 : vector<16x512xf32>
    %17 = vector.extract_strided_slice %16 {offsets = [0, 0], sizes = [16, 128], strides = [1, 1]} : vector<16x512xf32> to vector<16x128xf32>
    %18 = arith.negf %17 : vector<16x128xf32>
    %19 = math.exp %18 : vector<16x128xf32>
    %cst_15 = arith.constant 1.000000e+00 : f32
    %20 = vector.broadcast %cst_15 : f32 to vector<16x128xf32>
    %21 = arith.addf %20, %19 : vector<16x128xf32>
    %22 = arith.divf %20, %21 : vector<16x128xf32>
    %23 = vector.extract_strided_slice %16 {offsets = [0, 128], sizes = [16, 128], strides = [1, 1]} : vector<16x512xf32> to vector<16x128xf32>
    %24 = arith.negf %23 : vector<16x128xf32>
    %25 = math.exp %24 : vector<16x128xf32>
    %cst_16 = arith.constant 1.000000e+00 : f32
    %26 = vector.broadcast %cst_16 : f32 to vector<16x128xf32>
    %27 = arith.addf %26, %25 : vector<16x128xf32>
    %28 = arith.divf %26, %27 : vector<16x128xf32>
    %29 = vector.extract_strided_slice %16 {offsets = [0, 256], sizes = [16, 128], strides = [1, 1]} : vector<16x512xf32> to vector<16x128xf32>
    %30 = arith.negf %29 : vector<16x128xf32>
    %31 = math.exp %30 : vector<16x128xf32>
    %cst_17 = arith.constant 1.000000e+00 : f32
    %32 = vector.broadcast %cst_17 : f32 to vector<16x128xf32>
    %33 = arith.addf %32, %31 : vector<16x128xf32>
    %34 = arith.divf %32, %33 : vector<16x128xf32>
    %35 = vector.extract_strided_slice %16 {offsets = [0, 384], sizes = [16, 128], strides = [1, 1]} : vector<16x512xf32> to vector<16x128xf32>
    %36 = math.tanh %35 : vector<16x128xf32>
    %c0_18 = arith.constant 0 : index
    %c0_19 = arith.constant 0 : index
    %37 = vector.load %arg3[%c0_18, %c0_19] : memref<16x128xf32, #tpu.memory_space<vmem>>, vector<16x128xf32>
    %38 = arith.mulf %22, %37 : vector<16x128xf32>
    %39 = arith.mulf %28, %36 : vector<16x128xf32>
    %40 = arith.addf %38, %39 : vector<16x128xf32>
    %41 = math.tanh %40 : vector<16x128xf32>
    %42 = arith.mulf %41, %34 : vector<16x128xf32>
    %c0_20 = arith.constant 0 : index
    %c0_21 = arith.constant 0 : index
    %43 = vector.load %arg8[%c0_20, %c0_21] : memref<16x128xf32, #tpu.memory_space<vmem>>, vector<16x128xf32>
    tpu.vector_store %arg8[%c0_20, %c0_21], %40 {strides = array<i32>} : memref<16x128xf32, #tpu.memory_space<vmem>>, vector<16x128xf32>,
    %c0_22 = arith.constant 0 : index
    %c0_23 = arith.constant 0 : index
    %44 = vector.load %arg9[%c0_22, %c0_23] : memref<16x128xf32, #tpu.memory_space<vmem>>, vector<16x128xf32>
    tpu.vector_store %arg9[%c0_22, %c0_23], %42 {strides = array<i32>} : memref<16x128xf32, #tpu.memory_space<vmem>>, vector<16x128xf32>,
    return
  }
}

</mosaic_0001>

<llo_original>
// kernel: lsthm_forward.1
$region0: #{lsthm_forward.1}
  #allocation0 [shape = 'u32[]', space=smem, size = 0x4, offset = 0x4, fixed_abs, tag = 'smem constant byte address 0x4 - core index']
  #allocation1 [shape = 'u32[72,128]{1,0:T(1,128)}', space=vmem, size = 0x9000, scoped, tag = 'internal scratch']
  %s0 = inlined_call_operand.hbm [shape: f32[16,64], index: 0, kind: input, shape index: {}]
  %s1 = inlined_call_operand.hbm [shape: f32[16,128], index: 1, kind: input, shape index: {}]
  %s2 = inlined_call_operand.hbm [shape: f32[16,32], index: 2, kind: input, shape index: {}]
  %s3 = inlined_call_operand.hbm [shape: f32[16,128], index: 3, kind: input, shape index: {}]
  %s4 = inlined_call_operand.hbm [shape: bf16[64,512], index: 4, kind: input, shape index: {}]
  %s5 = inlined_call_operand.hbm [shape: bf16[128,512], index: 5, kind: input, shape index: {}]
  %s6 = inlined_call_operand.hbm [shape: bf16[32,512], index: 6, kind: input, shape index: {}]
  %s7 = inlined_call_operand.vmem [shape: f32[1,512], index: 7, kind: input, shape index: {}]
  %s8 = inlined_call_operand.hbm [shape: f32[16,128], index: 8, kind: output, shape index: {0}]
  %s9 = inlined_call_operand.hbm [shape: f32[16,128], index: 9, kind: output, shape index: {1}]
  %10 = xla_tuple %s8, %s9
  %s11 = sld [smem:[#allocation0]]
  $region78: #{lsthm_forward.1} parent=0
    _
  %s13 = ssub.s32 1, %s11
  %s14 = scalar_select 0, %s13, %s11
  $region1: #{lsthm_forward.1} parent=0
    #allocation2 [shape = 'u8[8192]{0}', space=vmem, size = 0x2000, scoped, tag = 'input window, operand 0, single buffered']
    #allocation3 [shape = 's32[1]{0}', space=sflag, size = 0x4, scoped, tag = 'scoped memory for lsthm_forward.1']
    #allocation4 [shape = 's32[1]{0}', space=sflag, size = 0x4, scoped, tag = 'scoped memory for lsthm_forward.1']
    #allocation5 [shape = 'u8[8192]{0}', space=vmem, size = 0x2000, scoped, tag = 'input window, operand 1, single buffered']
    #allocation6 [shape = 's32[1]{0}', space=sflag, size = 0x4, scoped, tag = 'scoped memory for lsthm_forward.1']
    #allocation7 [shape = 'u8[8192]{0}', space=vmem, size = 0x2000, scoped, tag = 'input window, operand 2, single buffered']
    #allocation8 [shape = 'u8[8192]{0}', space=vmem, size = 0x2000, scoped, tag = 'input window, operand 3, single buffered']
    #allocation9 [shape = 's32[1]{0}', space=sflag, size = 0x4, scoped, tag = 'scoped memory for lsthm_forward.1']
    #allocation10 [shape = 'u8[65536]{0}', space=vmem, size = 0x10000, scoped, tag = 'input window, operand 4, single buffered']
    #allocation11 [shape = 'u8[131072]{0}', space=vmem, size = 0x20000, scoped, tag = 'input window, operand 5, single buffered']
    #allocation12 [shape = 's32[1]{0}', space=sflag, size = 0x4, scoped, tag = 'scoped memory for lsthm_forward.1']
    #allocation13 [shape = 'u8[32768]{0}', space=vmem, size = 0x8000, scoped, tag = 'input window, operand 6, single buffered']
    #allocation14 [shape = 'u8[8192]{0}', space=vmem, size = 0x2000, scoped, tag = 'output window, operand 0, single buffered']
    #allocation15 [shape = 'u8[8192]{0}', space=vmem, size = 0x2000, scoped, tag = 'output window, operand 1, single buffered']
    #allocation16 [shape = 's32[1]{0}', space=sflag, size = 0x4, scoped, tag = 'scoped memory for lsthm_forward.1']
    %15 = vsyncpa [#allocation3], 0
    %16 = vsyncpa [#allocation6], 0
    %17 = vsyncpa [#allocation9], 0
    %18 = vsyncpa [#allocation12], 0
    %19 = vsyncpa [#allocation4], 0
    %20 = vsyncpa [#allocation16], 0
    // Predicated region
    $region2: #{lsthm_forward.1} parent=1 // pred_check
      _
    $region3: #{lsthm_forward.1} parent=1 // pred_check_branch
      %22 = sbr.rel (0) target = $region5
    $region4: #{lsthm_forward.1} parent=1 // pred_region
      %24 = vsyncadd [#allocation3], 0
      %s25 = sshll.u32 %s0, 4
      %s26 = int_to_ptr.hbm [resolvable:$true] %s25
      %s27 = sshll.u32 [#allocation2], 4
      %s28 = int_to_ptr.vmem [resolvable:$true] %s27
      %33 = dma.hbm_to_vmem [thread:$0]  %s26, 256, %s28, [#allocation3], 128, 128, 8
    $region5: #{lsthm_forward.1} parent=1 // pred_fallthru
      _
    // Predicated region
    $region6: #{lsthm_forward.1} parent=1 // pred_check
      _
    $region7: #{lsthm_forward.1} parent=1 // pred_check_branch
      %35 = sbr.rel (0) target = $region9
    $region8: #{lsthm_forward.1} parent=1 // pred_region
      %37 = vsyncadd [#allocation6], 0
      %s38 = sshll.u32 %s1, 4
      %s39 = int_to_ptr.hbm [resolvable:$true] %s38
      %s40 = sshll.u32 [#allocation5], 4
      %s41 = int_to_ptr.vmem [resolvable:$true] %s40
      %46 = dma.hbm_to_vmem [thread:$0]  %s39, 256, %s41, [#allocation6], 128, 128, 8
    $region9: #{lsthm_forward.1} parent=1 // pred_fallthru
      _
    // Predicated region
    $region10: #{lsthm_forward.1} parent=1 // pred_check
      _
    $region11: #{lsthm_forward.1} parent=1 // pred_check_branch
      %48 = sbr.rel (0) target = $region13
    $region12: #{lsthm_forward.1} parent=1 // pred_region
      %50 = vsyncadd [#allocation6], 0
      %s51 = sshll.u32 %s2, 4
      %s52 = int_to_ptr.hbm [resolvable:$true] %s51
      %s53 = sshll.u32 [#allocation7], 4
      %s54 = int_to_ptr.vmem [resolvable:$true] %s53
      %59 = dma.hbm_to_vmem [thread:$0]  %s52, 256, %s54, [#allocation6], 128, 128, 8
    $region13: #{lsthm_forward.1} parent=1 // pred_fallthru
      _
    // Predicated region
    $region14: #{lsthm_forward.1} parent=1 // pred_check
      _
    $region15: #{lsthm_forward.1} parent=1 // pred_check_branch
      %61 = sbr.rel (0) target = $region17
    $region16: #{lsthm_forward.1} parent=1 // pred_region
      %63 = vsyncadd [#allocation9], 0
      %s64 = sshll.u32 %s3, 4
      %s65 = int_to_ptr.hbm [resolvable:$true] %s64
      %s66 = sshll.u32 [#allocation8], 4
      %s67 = int_to_ptr.vmem [resolvable:$true] %s66
      %72 = dma.hbm_to_vmem [thread:$0]  %s65, 256, %s67, [#allocation9], 128, 128, 8
    $region17: #{lsthm_forward.1} parent=1 // pred_fallthru
      _
    // Predicated region
    $region18: #{lsthm_forward.1} parent=1 // pred_check
      _
    $region19: #{lsthm_forward.1} parent=1 // pred_check_branch
      %74 = sbr.rel (0) target = $region21
    $region20: #{lsthm_forward.1} parent=1 // pred_region
      %76 = vsyncadd [#allocation9], 0
      %s77 = sshll.u32 %s4, 4
      %s78 = int_to_ptr.hbm [resolvable:$true] %s77
      %s79 = sshll.u32 [#allocation10], 4
      %s80 = int_to_ptr.vmem [resolvable:$true] %s79
      %85 = dma.hbm_to_vmem [thread:$0]  %s78, 2048, %s80, [#allocation9], 256, 256, 16
    $region21: #{lsthm_forward.1} parent=1 // pred_fallthru
      _
    // Predicated region
    $region22: #{lsthm_forward.1} parent=1 // pred_check
      _
    $region23: #{lsthm_forward.1} parent=1 // pred_check_branch
      %87 = sbr.rel (0) target = $region25
    $region24: #{lsthm_forward.1} parent=1 // pred_region
      %89 = vsyncadd [#allocation12], 0
      %s90 = sshll.u32 %s5, 4
      %s91 = int_to_ptr.hbm [resolvable:$true] %s90
      %s92 = sshll.u32 [#allocation11], 4
      %s93 = int_to_ptr.vmem [resolvable:$true] %s92
      %98 = dma.hbm_to_vmem [thread:$0]  %s91, 4096, %s93, [#allocation12], 256, 256, 16
    $region25: #{lsthm_forward.1} parent=1 // pred_fallthru
      _
    // Predicated region
    $region26: #{lsthm_forward.1} parent=1 // pred_check
      _
    $region27: #{lsthm_forward.1} parent=1 // pred_check_branch
      %100 = sbr.rel (0) target = $region29
    $region28: #{lsthm_forward.1} parent=1 // pred_region
      %102 = vsyncadd [#allocation12], 0
      %s103 = sshll.u32 %s6, 4
      %s104 = int_to_ptr.hbm [resolvable:$true] %s103
      %s105 = sshll.u32 [#allocation13], 4
      %s106 = int_to_ptr.vmem [resolvable:$true] %s105
      %111 = dma.hbm_to_vmem [thread:$0]  %s104, 1024, %s106, [#allocation12], 256, 256, 16
    $region29: #{lsthm_forward.1} parent=1 // pred_fallthru
      _
    // Predicated region
    $region30: #{lsthm_forward.1} parent=1 // pred_check
      _
    $region31: #{lsthm_forward.1} parent=1 // pred_check_branch
      %113 = sbr.rel (0) target = $region33
    $region32: #{lsthm_forward.1} parent=1 // pred_region
      _
    $region33: #{lsthm_forward.1} parent=1 // pred_fallthru
      _
    // Predicated region
    $region34: #{lsthm_forward.1} parent=1 // pred_check
      _
    $region35: #{lsthm_forward.1} parent=1 // pred_check_branch
      %115 = sbr.rel (0) target = $region37
    $region36: #{lsthm_forward.1} parent=1 // pred_region
      %117 = dma.done [#allocation3], 256
    $region37: #{lsthm_forward.1} parent=1 // pred_fallthru
      _
    // Predicated region
    $region38: #{lsthm_forward.1} parent=1 // pred_check
      _
    $region39: #{lsthm_forward.1} parent=1 // pred_check_branch
      %119 = sbr.rel (0) target = $region41
    $region40: #{lsthm_forward.1} parent=1 // pred_region
      %121 = dma.done [#allocation6], 256
    $region41: #{lsthm_forward.1} parent=1 // pred_fallthru
      _
    // Predicated region
    $region42: #{lsthm_forward.1} parent=1 // pred_check
      _
    $region43: #{lsthm_forward.1} parent=1 // pred_check_branch
      %123 = sbr.rel (0) target = $region45
    $region44: #{lsthm_forward.1} parent=1 // pred_region
      %125 = dma.done [#allocation6], 256
    $region45: #{lsthm_forward.1} parent=1 // pred_fallthru
      _
    // Predicated region
    $region46: #{lsthm_forward.1} parent=1 // pred_check
      _
    $region47: #{lsthm_forward.1} parent=1 // pred_check_branch
      %127 = sbr.rel (0) target = $region49
    $region48: #{lsthm_forward.1} parent=1 // pred_region
      %129 = dma.done [#allocation9], 256
    $region49: #{lsthm_forward.1} parent=1 // pred_fallthru
      _
    // Predicated region
    $region50: #{lsthm_forward.1} parent=1 // pred_check
      _
    $region51: #{lsthm_forward.1} parent=1 // pred_check_branch
      %131 = sbr.rel (0) target = $region53
    $region52: #{lsthm_forward.1} parent=1 // pred_region
      %133 = dma.done [#allocation9], 2048
    $region53: #{lsthm_forward.1} parent=1 // pred_fallthru
      _
    // Predicated region
    $region54: #{lsthm_forward.1} parent=1 // pred_check
      _
    $region55: #{lsthm_forward.1} parent=1 // pred_check_branch
      %135 = sbr.rel (0) target = $region57
    $region56: #{lsthm_forward.1} parent=1 // pred_region
      %137 = dma.done [#allocation12], 4096
    $region57: #{lsthm_forward.1} parent=1 // pred_fallthru
      _
    // Predicated region
    $region58: #{lsthm_forward.1} parent=1 // pred_check
      _
    $region59: #{lsthm_forward.1} parent=1 // pred_check_branch
      %139 = sbr.rel (0) target = $region61
    $region60: #{lsthm_forward.1} parent=1 // pred_region
      %141 = dma.done [#allocation12], 1024
    $region61: #{lsthm_forward.1} parent=1 // pred_fallthru
      _
    %v143 = vld [vmem:[#allocation2] sm:$0xff]
    %v144 = vld [vmem:[#allocation2 + $0x8] sm:$0xff]
    %v145 = vpack.c.bf16 %v144, %v143
    %v146 = vld [vmem:[#allocation10] sm:$0xff]
    %v147 = vld [vmem:[#allocation10 + $0x8] sm:$0xff]
    %v148 = vld [vmem:[#allocation10 + $0x10] sm:$0xff]
    %v149 = vld [vmem:[#allocation10 + $0x18] sm:$0xff]
    %v150 = vld [vmem:[#allocation10 + $0x20] sm:$0xff]
    %v151 = vld [vmem:[#allocation10 + $0x28] sm:$0xff]
    %v152 = vld [vmem:[#allocation10 + $0x30] sm:$0xff]
    %v153 = vld [vmem:[#allocation10 + $0x38] sm:$0xff]
    %v154 = vld [vmem:[#allocation10 + $0x40] sm:$0xff]
    %v155 = vld [vmem:[#allocation10 + $0x48] sm:$0xff]
    %v156 = vld [vmem:[#allocation10 + $0x50] sm:$0xff]
    %v157 = vld [vmem:[#allocation10 + $0x58] sm:$0xff]
    %v158 = vld [vmem:[#allocation10 + $0x60] sm:$0xff]
    %v159 = vld [vmem:[#allocation10 + $0x68] sm:$0xff]
    %v160 = vld [vmem:[#allocation10 + $0x70] sm:$0xff]
    %v161 = vld [vmem:[#allocation10 + $0x78] sm:$0xff]
    %v162 = vld [vmem:[#allocation5] sm:$0xff]
    %v163 = vld [vmem:[#allocation5 + $0x8] sm:$0xff]
    %v164 = vpack.c.bf16 %v163, %v162
    %v165 = vld [vmem:[#allocation11] sm:$0xff]
    %v166 = vld [vmem:[#allocation11 + $0x8] sm:$0xff]
    %v167 = vld [vmem:[#allocation11 + $0x10] sm:$0xff]
    %v168 = vld [vmem:[#allocation11 + $0x18] sm:$0xff]
    %v169 = vld [vmem:[#allocation11 + $0x20] sm:$0xff]
    %v170 = vld [vmem:[#allocation11 + $0x28] sm:$0xff]
    %v171 = vld [vmem:[#allocation11 + $0x30] sm:$0xff]
    %v172 = vld [vmem:[#allocation11 + $0x38] sm:$0xff]
    %v173 = vld [vmem:[#allocation11 + $0x40] sm:$0xff]
    %v174 = vld [vmem:[#allocation11 + $0x48] sm:$0xff]
    %v175 = vld [vmem:[#allocation11 + $0x50] sm:$0xff]
    %v176 = vld [vmem:[#allocation11 + $0x58] sm:$0xff]
    %v177 = vld [vmem:[#allocation11 + $0x60] sm:$0xff]
    %v178 = vld [vmem:[#allocation11 + $0x68] sm:$0xff]
    %v179 = vld [vmem:[#allocation11 + $0x70] sm:$0xff]
    %v180 = vld [vmem:[#allocation11 + $0x78] sm:$0xff]
    %v181 = vld [vmem:[#allocation11 + $0x80] sm:$0xff]
    %v182 = vld [vmem:[#allocation11 + $0x88] sm:$0xff]
    %v183 = vld [vmem:[#allocation11 + $0x90] sm:$0xff]
    %v184 = vld [vmem:[#allocation11 + $0x98] sm:$0xff]
    %v185 = vld [vmem:[#allocation11 + $0xa0] sm:$0xff]
    %v186 = vld [vmem:[#allocation11 + $0xa8] sm:$0xff]
    %v187 = vld [vmem:[#allocation11 + $0xb0] sm:$0xff]
    %v188 = vld [vmem:[#allocation11 + $0xb8] sm:$0xff]
    %v189 = vld [vmem:[#allocation11 + $0xc0] sm:$0xff]
    %v190 = vld [vmem:[#allocation11 + $0xc8] sm:$0xff]
    %v191 = vld [vmem:[#allocation11 + $0xd0] sm:$0xff]
    %v192 = vld [vmem:[#allocation11 + $0xd8] sm:$0xff]
    %v193 = vld [vmem:[#allocation11 + $0xe0] sm:$0xff]
    %v194 = vld [vmem:[#allocation11 + $0xe8] sm:$0xff]
    %v195 = vld [vmem:[#allocation11 + $0xf0] sm:$0xff]
    %v196 = vld [vmem:[#allocation11 + $0xf8] sm:$0xff]
    %v229 = vunpack.c.l.b16 %v165
    %v230 = vunpack.c.h.b16 %v165
    %v231 = vunpack.c.l.b16 %v166
    %v232 = vunpack.c.h.b16 %v166
    %v233 = vunpack.c.l.b16 %v167
    %v234 = vunpack.c.h.b16 %v167
    %v235 = vunpack.c.l.b16 %v168
    %v236 = vunpack.c.h.b16 %v168
    %v237 = vunpack.c.l.b16 %v169
    %v238 = vunpack.c.h.b16 %v169
    %v239 = vunpack.c.l.b16 %v170
    %v240 = vunpack.c.h.b16 %v170
    %v241 = vunpack.c.l.b16 %v171
    %v242 = vunpack.c.h.b16 %v171
    %v243 = vunpack.c.l.b16 %v172
    %v244 = vunpack.c.h.b16 %v172
    %v245 = vunpack.c.l.b16 %v173
    %v246 = vunpack.c.h.b16 %v173
    %v247 = vunpack.c.l.b16 %v174
    %v248 = vunpack.c.h.b16 %v174
    %v249 = vunpack.c.l.b16 %v175
    %v250 = vunpack.c.h.b16 %v175
    %v251 = vunpack.c.l.b16 %v176
    %v252 = vunpack.c.h.b16 %v176
    %v253 = vunpack.c.l.b16 %v177
    %v254 = vunpack.c.h.b16 %v177
    %v255 = vunpack.c.l.b16 %v178
    %v256 = vunpack.c.h.b16 %v178
    %v257 = vunpack.c.l.b16 %v179
    %v258 = vunpack.c.h.b16 %v179
    %v259 = vunpack.c.l.b16 %v180
    %v260 = vunpack.c.h.b16 %v180
    %v261 = vunpack.c.l.b16 %v181
    %v262 = vunpack.c.h.b16 %v181
    %v263 = vunpack.c.l.b16 %v182
    %v264 = vunpack.c.h.b16 %v182
    %v265 = vunpack.c.l.b16 %v183
    %v266 = vunpack.c.h.b16 %v183
    %v267 = vunpack.c.l.b16 %v184
    %v268 = vunpack.c.h.b16 %v184
    %v269 = vunpack.c.l.b16 %v185
    %v270 = vunpack.c.h.b16 %v185
    %v271 = vunpack.c.l.b16 %v186
    %v272 = vunpack.c.h.b16 %v186
    %v273 = vunpack.c.l.b16 %v187
    %v274 = vunpack.c.h.b16 %v187
    %v275 = vunpack.c.l.b16 %v188
    %v276 = vunpack.c.h.b16 %v188
    %v277 = vunpack.c.l.b16 %v189
    %v278 = vunpack.c.h.b16 %v189
    %v279 = vunpack.c.l.b16 %v190
    %v280 = vunpack.c.h.b16 %v190
    %v281 = vunpack.c.l.b16 %v191
    %v282 = vunpack.c.h.b16 %v191
    %v283 = vunpack.c.l.b16 %v192
    %v284 = vunpack.c.h.b16 %v192
    %v285 = vunpack.c.l.b16 %v193
    %v286 = vunpack.c.h.b16 %v193
    %v287 = vunpack.c.l.b16 %v194
    %v288 = vunpack.c.h.b16 %v194
    %v289 = vunpack.c.l.b16 %v195
    %v290 = vunpack.c.h.b16 %v195
    %v291 = vunpack.c.l.b16 %v196
    %v292 = vunpack.c.h.b16 %v196
    %v293 = vpack.c.b16 %v233, %v229
    %v294 = vpack.c.b16 %v234, %v230
    %v295 = vpack.c.b16 %v235, %v231
    %v296 = vpack.c.b16 %v236, %v232
    %v297 = vpack.c.b16 %v241, %v237
    %v298 = vpack.c.b16 %v242, %v238
    %v299 = vpack.c.b16 %v243, %v239
    %v300 = vpack.c.b16 %v244, %v240
    %v301 = vpack.c.b16 %v249, %v245
    %v302 = vpack.c.b16 %v250, %v246
    %v303 = vpack.c.b16 %v251, %v247
    %v304 = vpack.c.b16 %v252, %v248
    %v305 = vpack.c.b16 %v257, %v253
    %v306 = vpack.c.b16 %v258, %v254
    %v307 = vpack.c.b16 %v259, %v255
    %v308 = vpack.c.b16 %v260, %v256
    %v309 = vpack.c.b16 %v265, %v261
    %v310 = vpack.c.b16 %v266, %v262
    %v311 = vpack.c.b16 %v267, %v263
    %v312 = vpack.c.b16 %v268, %v264
    %v313 = vpack.c.b16 %v273, %v269
    %v314 = vpack.c.b16 %v274, %v270
    %v315 = vpack.c.b16 %v275, %v271
    %v316 = vpack.c.b16 %v276, %v272
    %v317 = vpack.c.b16 %v281, %v277
    %v318 = vpack.c.b16 %v282, %v278
    %v319 = vpack.c.b16 %v283, %v279
    %v320 = vpack.c.b16 %v284, %v280
    %v321 = vpack.c.b16 %v289, %v285
    %v322 = vpack.c.b16 %v290, %v286
    %v323 = vpack.c.b16 %v291, %v287
    %v324 = vpack.c.b16 %v292, %v288
    %357 = vmatpush.bf16.msra.mxu0 %v321
    %358 = vmatpush.bf16.msra.mxu0 %v317
    %359 = vmatpush.bf16.msra.mxu0 %v313
    %360 = vmatpush.bf16.msra.mxu0 %v309
    %361 = vmatpush.bf16.msra.mxu0 %v305
    %362 = vmatpush.bf16.msra.mxu0 %v301
    %363 = vmatpush.bf16.msra.mxu0 %v297
    %364 = vmatpush.bf16.msra.mxu0 %v293
    %365 = vmatmul.bf16.gmra.mxu0 %v164
    %v366 = vpop.f32.mrf.mxu0
    %v367 = vadd.f32 0.0, %v366
    %v368 = vpop.f32.mrf.mxu0
    %v369 = vadd.f32 0.0, %v368
    %370 = vdwg.mxu0
    %371 = vmatpush.bf16.msra.mxu0 %v322
    %372 = vmatpush.bf16.msra.mxu0 %v318
    %373 = vmatpush.bf16.msra.mxu0 %v314
    %374 = vmatpush.bf16.msra.mxu0 %v310
    %375 = vmatpush.bf16.msra.mxu0 %v306
    %376 = vmatpush.bf16.msra.mxu0 %v302
    %377 = vmatpush.bf16.msra.mxu0 %v298
    %378 = vmatpush.bf16.msra.mxu0 %v294
    %379 = vmatmul.bf16.gmra.mxu0 %v164
    %v380 = vpop.f32.mrf.mxu0
    %v381 = vadd.f32 0.0, %v380
    %v382 = vpop.f32.mrf.mxu0
    %v383 = vadd.f32 0.0, %v382
    %384 = vdwg.mxu0
    %385 = vmatpush.bf16.msra.mxu0 %v323
    %386 = vmatpush.bf16.msra.mxu0 %v319
    %387 = vmatpush.bf16.msra.mxu0 %v315
    %388 = vmatpush.bf16.msra.mxu0 %v311
    %389 = vmatpush.bf16.msra.mxu0 %v307
    %390 = vmatpush.bf16.msra.mxu0 %v303
    %391 = vmatpush.bf16.msra.mxu0 %v299
    %392 = vmatpush.bf16.msra.mxu0 %v295
    %393 = vmatmul.bf16.gmra.mxu0 %v164
    %v394 = vpop.f32.mrf.mxu0
    %v395 = vadd.f32 0.0, %v394
    %v396 = vpop.f32.mrf.mxu0
    %v397 = vadd.f32 0.0, %v396
    %398 = vdwg.mxu0
    %399 = vmatpush.bf16.msra.mxu0 %v324
    %400 = vmatpush.bf16.msra.mxu0 %v320
    %401 = vmatpush.bf16.msra.mxu0 %v316
    %402 = vmatpush.bf16.msra.mxu0 %v312
    %403 = vmatpush.bf16.msra.mxu0 %v308
    %404 = vmatpush.bf16.msra.mxu0 %v304
    %405 = vmatpush.bf16.msra.mxu0 %v300
    %406 = vmatpush.bf16.msra.mxu0 %v296
    %407 = vmatmul.bf16.gmra.mxu0 %v164
    %v408 = vpop.f32.mrf.mxu0
    %v409 = vadd.f32 0.0, %v408
    %v410 = vpop.f32.mrf.mxu0
    %v411 = vadd.f32 0.0, %v410
    %412 = vdwg.mxu0
    %v429 = vunpack.c.l.b16 %v146
    %v430 = vunpack.c.h.b16 %v146
    %v431 = vunpack.c.l.b16 %v147
    %v432 = vunpack.c.h.b16 %v147
    %v433 = vunpack.c.l.b16 %v148
    %v434 = vunpack.c.h.b16 %v148
    %v435 = vunpack.c.l.b16 %v149
    %v436 = vunpack.c.h.b16 %v149
    %v437 = vunpack.c.l.b16 %v150
    %v438 = vunpack.c.h.b16 %v150
    %v439 = vunpack.c.l.b16 %v151
    %v440 = vunpack.c.h.b16 %v151
    %v441 = vunpack.c.l.b16 %v152
    %v442 = vunpack.c.h.b16 %v152
    %v443 = vunpack.c.l.b16 %v153
    %v444 = vunpack.c.h.b16 %v153
    %v445 = vunpack.c.l.b16 %v154
    %v446 = vunpack.c.h.b16 %v154
    %v447 = vunpack.c.l.b16 %v155
    %v448 = vunpack.c.h.b16 %v155
    %v449 = vunpack.c.l.b16 %v156
    %v450 = vunpack.c.h.b16 %v156
    %v451 = vunpack.c.l.b16 %v157
    %v452 = vunpack.c.h.b16 %v157
    %v453 = vunpack.c.l.b16 %v158
    %v454 = vunpack.c.h.b16 %v158
    %v455 = vunpack.c.l.b16 %v159
    %v456 = vunpack.c.h.b16 %v159
    %v457 = vunpack.c.l.b16 %v160
    %v458 = vunpack.c.h.b16 %v160
    %v459 = vunpack.c.l.b16 %v161
    %v460 = vunpack.c.h.b16 %v161
    %v461 = vpack.c.b16 %v433, %v429
    %v462 = vpack.c.b16 %v434, %v430
    %v463 = vpack.c.b16 %v435, %v431
    %v464 = vpack.c.b16 %v436, %v432
    %v465 = vpack.c.b16 %v441, %v437
    %v466 = vpack.c.b16 %v442, %v438
    %v467 = vpack.c.b16 %v443, %v439
    %v468 = vpack.c.b16 %v444, %v440
    %v469 = vpack.c.b16 %v449, %v445
    %v470 = vpack.c.b16 %v450, %v446
    %v471 = vpack.c.b16 %v451, %v447
    %v472 = vpack.c.b16 %v452, %v448
    %v473 = vpack.c.b16 %v457, %v453
    %v474 = vpack.c.b16 %v458, %v454
    %v475 = vpack.c.b16 %v459, %v455
    %v476 = vpack.c.b16 %v460, %v456
    %vm493 = vcmask 523264
    %v495 = vsel %vm493, %v145, 0
    %497 = vmatpush.bf16.msra.mxu0 0
    %498 = vmatpush.bf16.msra.mxu0 0
    %499 = vmatpush.bf16.msra.mxu0 0
    %500 = vmatpush.bf16.msra.mxu0 0
    %501 = vmatpush.bf16.msra.mxu0 %v473
    %502 = vmatpush.bf16.msra.mxu0 %v469
    %503 = vmatpush.bf16.msra.mxu0 %v465
    %504 = vmatpush.bf16.msra.mxu0 %v461
    %505 = vmatmul.bf16.gmra.mxu0 %v495
    %v506 = vpop.f32.mrf.mxu0
    %v507 = vadd.f32 %v367, %v506
    %v508 = vpop.f32.mrf.mxu0
    %v509 = vadd.f32 %v369, %v508
    %510 = vdwg.mxu0
    %511 = vmatpush.bf16.msra.mxu0 0
    %512 = vmatpush.bf16.msra.mxu0 0
    %513 = vmatpush.bf16.msra.mxu0 0
    %514 = vmatpush.bf16.msra.mxu0 0
    %515 = vmatpush.bf16.msra.mxu0 %v474
    %516 = vmatpush.bf16.msra.mxu0 %v470
    %517 = vmatpush.bf16.msra.mxu0 %v466
    %518 = vmatpush.bf16.msra.mxu0 %v462
    %519 = vmatmul.bf16.gmra.mxu0 %v495
    %v520 = vpop.f32.mrf.mxu0
    %v521 = vadd.f32 %v381, %v520
    %v522 = vpop.f32.mrf.mxu0
    %v523 = vadd.f32 %v383, %v522
    %524 = vdwg.mxu0
    %525 = vmatpush.bf16.msra.mxu0 0
    %526 = vmatpush.bf16.msra.mxu0 0
    %527 = vmatpush.bf16.msra.mxu0 0
    %528 = vmatpush.bf16.msra.mxu0 0
    %529 = vmatpush.bf16.msra.mxu0 %v475
    %530 = vmatpush.bf16.msra.mxu0 %v471
    %531 = vmatpush.bf16.msra.mxu0 %v467
    %532 = vmatpush.bf16.msra.mxu0 %v463
    %533 = vmatmul.bf16.gmra.mxu0 %v495
    %v534 = vpop.f32.mrf.mxu0
    %v535 = vadd.f32 %v395, %v534
    %v536 = vpop.f32.mrf.mxu0
    %v537 = vadd.f32 %v397, %v536
    %538 = vdwg.mxu0
    %539 = vmatpush.bf16.msra.mxu0 0
    %540 = vmatpush.bf16.msra.mxu0 0
    %541 = vmatpush.bf16.msra.mxu0 0
    %542 = vmatpush.bf16.msra.mxu0 0
    %543 = vmatpush.bf16.msra.mxu0 %v476
    %544 = vmatpush.bf16.msra.mxu0 %v472
    %545 = vmatpush.bf16.msra.mxu0 %v468
    %546 = vmatpush.bf16.msra.mxu0 %v464
    %547 = vmatmul.bf16.gmra.mxu0 %v495
    %v548 = vpop.f32.mrf.mxu0
    %v549 = vadd.f32 %v409, %v548
    %v550 = vpop.f32.mrf.mxu0
    %v551 = vadd.f32 %v411, %v550
    %552 = vdwg.mxu0
    %v553 = vld [vmem:[#allocation7] sm:$0xff]
    %v554 = vld [vmem:[#allocation7 + $0x8] sm:$0xff]
    %v555 = vpack.c.bf16 %v554, %v553
    %v556 = vld [vmem:[#allocation13] sm:$0xff]
    %v557 = vld [vmem:[#allocation13 + $0x8] sm:$0xff]
    %v558 = vld [vmem:[#allocation13 + $0x10] sm:$0xff]
    %v559 = vld [vmem:[#allocation13 + $0x18] sm:$0xff]
    %v560 = vld [vmem:[#allocation13 + $0x20] sm:$0xff]
    %v561 = vld [vmem:[#allocation13 + $0x28] sm:$0xff]
    %v562 = vld [vmem:[#allocation13 + $0x30] sm:$0xff]
    %v563 = vld [vmem:[#allocation13 + $0x38] sm:$0xff]
    %v572 = vunpack.c.l.b16 %v556
    %v573 = vunpack.c.h.b16 %v556
    %v574 = vunpack.c.l.b16 %v557
    %v575 = vunpack.c.h.b16 %v557
    %v576 = vunpack.c.l.b16 %v558
    %v577 = vunpack.c.h.b16 %v558
    %v578 = vunpack.c.l.b16 %v559
    %v579 = vunpack.c.h.b16 %v559
    %v580 = vunpack.c.l.b16 %v560
    %v581 = vunpack.c.h.b16 %v560
    %v582 = vunpack.c.l.b16 %v561
    %v583 = vunpack.c.h.b16 %v561
    %v584 = vunpack.c.l.b16 %v562
    %v585 = vunpack.c.h.b16 %v562
    %v586 = vunpack.c.l.b16 %v563
    %v587 = vunpack.c.h.b16 %v563
    %v588 = vpack.c.b16 %v576, %v572
    %v589 = vpack.c.b16 %v577, %v573
    %v590 = vpack.c.b16 %v578, %v574
    %v591 = vpack.c.b16 %v579, %v575
    %v592 = vpack.c.b16 %v584, %v580
    %v593 = vpack.c.b16 %v585, %v581
    %v594 = vpack.c.b16 %v586, %v582
    %v595 = vpack.c.b16 %v587, %v583
    %vm604 = vcmask 261120
    %v606 = vsel %vm604, %v555, 0
    %608 = vmatpush.bf16.msra.mxu0 0
    %609 = vmatpush.bf16.msra.mxu0 0
    %610 = vmatpush.bf16.msra.mxu0 0
    %611 = vmatpush.bf16.msra.mxu0 0
    %612 = vmatpush.bf16.msra.mxu0 0
    %613 = vmatpush.bf16.msra.mxu0 0
    %614 = vmatpush.bf16.msra.mxu0 %v592
    %615 = vmatpush.bf16.msra.mxu0 %v588
    %616 = vmatmul.bf16.gmra.mxu0 %v606
    %v617 = vpop.f32.mrf.mxu0
    %v618 = vadd.f32 0.0, %v617
    %v619 = vpop.f32.mrf.mxu0
    %v620 = vadd.f32 0.0, %v619
    %621 = vdwg.mxu0
    %622 = vmatpush.bf16.msra.mxu0 0
    %623 = vmatpush.bf16.msra.mxu0 0
    %624 = vmatpush.bf16.msra.mxu0 0
    %625 = vmatpush.bf16.msra.mxu0 0
    %626 = vmatpush.bf16.msra.mxu0 0
    %627 = vmatpush.bf16.msra.mxu0 0
    %628 = vmatpush.bf16.msra.mxu0 %v593
    %629 = vmatpush.bf16.msra.mxu0 %v589
    %630 = vmatmul.bf16.gmra.mxu0 %v606
    %v631 = vpop.f32.mrf.mxu0
    %v632 = vadd.f32 0.0, %v631
    %v633 = vpop.f32.mrf.mxu0
    %v634 = vadd.f32 0.0, %v633
    %635 = vdwg.mxu0
    %636 = vmatpush.bf16.msra.mxu0 0
    %637 = vmatpush.bf16.msra.mxu0 0
    %638 = vmatpush.bf16.msra.mxu0 0
    %639 = vmatpush.bf16.msra.mxu0 0
    %640 = vmatpush.bf16.msra.mxu0 0
    %641 = vmatpush.bf16.msra.mxu0 0
    %642 = vmatpush.bf16.msra.mxu0 %v594
    %643 = vmatpush.bf16.msra.mxu0 %v590
    %644 = vmatmul.bf16.gmra.mxu0 %v606
    %v645 = vpop.f32.mrf.mxu0
    %v646 = vadd.f32 0.0, %v645
    %v647 = vpop.f32.mrf.mxu0
    %v648 = vadd.f32 0.0, %v647
    %649 = vdwg.mxu0
    %650 = vmatpush.bf16.msra.mxu0 0
    %651 = vmatpush.bf16.msra.mxu0 0
    %652 = vmatpush.bf16.msra.mxu0 0
    %653 = vmatpush.bf16.msra.mxu0 0
    %654 = vmatpush.bf16.msra.mxu0 0
    %655 = vmatpush.bf16.msra.mxu0 0
    %656 = vmatpush.bf16.msra.mxu0 %v595
    %657 = vmatpush.bf16.msra.mxu0 %v591
    %658 = vmatmul.bf16.gmra.mxu0 %v606
    %v659 = vpop.f32.mrf.mxu0
    %v660 = vadd.f32 0.0, %v659
    %v661 = vpop.f32.mrf.mxu0
    %v662 = vadd.f32 0.0, %v661
    %663 = vdwg.mxu0
    %v664 = vadd.f32 %v507, %v618
    %v665 = vadd.f32 %v521, %v632
    %v666 = vadd.f32 %v535, %v646
    %v667 = vadd.f32 %v549, %v660
    %v668 = vadd.f32 %v509, %v620
    %v669 = vadd.f32 %v523, %v634
    %v670 = vadd.f32 %v537, %v648
    %v671 = vadd.f32 %v551, %v662
    %v672 = vld [vmem:[%s7] sm:$0xf]
    %v674 = vperm.slane %v672, 0
    %v675 = vperm.slane %v672, 1
    %v676 = vperm.slane %v672, 2
    %v677 = vperm.slane %v672, 3
    %v682 = vadd.f32 %v664, %v674
    %v683 = vadd.f32 %v665, %v675
    %v684 = vadd.f32 %v666, %v676
    %v685 = vadd.f32 %v667, %v677
    %v686 = vadd.f32 %v668, %v674
    %v687 = vadd.f32 %v669, %v675
    %v688 = vadd.f32 %v670, %v676
    %v689 = vadd.f32 %v671, %v677
    %v690 = vxor.u32 %v682, 2147483648
    %v691 = vxor.u32 %v686, 2147483648
    %v692 = vmul.f32 %v690, 1.442695
    %v693 = vpow.pop %v692
    %v694 = vmul.f32 %v691, 1.442695
    %v695 = vpow.pop %v694
    %v696 = vadd.f32 %v693, 1.0
    %v697 = vadd.f32 %v695, 1.0
    %v698 = vrcp.pop %v696
    %v699 = vmul.f32 %v696, %v698
    %v700 = vsub.f32 1.0, %v699
    %v701 = vmul.f32 %v698, %v700
    %v702 = vadd.f32 %v698, %v701
    %vm703 = vweird.f32 %v696
    %vm704 = vweird.f32 %v698
    %vm705 = vmor %vm703, %vm704
    %v706 = vsel %vm705, %v698, %v702
    %v707 = vand.u32 2147483647, %v696
    %vm708 = vcmp.eq.f32.partialorder %v707, 8.507059e+37
    %v709 = vand.u32 %v696, 2147483648
    %v710 = vor.u32 1.1754944e-38, %v709
    %v711 = vsel %vm708, %v710, %v706
    %v712 = vmul.f32 1.0, %v711
    %v713 = vrcp.pop %v697
    %v714 = vmul.f32 %v697, %v713
    %v715 = vsub.f32 1.0, %v714
    %v716 = vmul.f32 %v713, %v715
    %v717 = vadd.f32 %v713, %v716
    %vm718 = vweird.f32 %v697
    %vm719 = vweird.f32 %v713
    %vm720 = vmor %vm718, %vm719
    %v721 = vsel %vm720, %v713, %v717
    %v722 = vand.u32 2147483647, %v697
    %vm723 = vcmp.eq.f32.partialorder %v722, 8.507059e+37
    %v724 = vand.u32 %v697, 2147483648
    %v725 = vor.u32 1.1754944e-38, %v724
    %v726 = vsel %vm723, %v725, %v721
    %v727 = vmul.f32 1.0, %v726
    %v728 = vxor.u32 %v683, 2147483648
    %v729 = vxor.u32 %v687, 2147483648
    %v730 = vmul.f32 %v728, 1.442695
    %v731 = vpow.pop %v730
    %v732 = vmul.f32 %v729, 1.442695
    %v733 = vpow.pop %v732
    %v734 = vadd.f32 %v731, 1.0
    %v735 = vadd.f32 %v733, 1.0
    %v736 = vrcp.pop %v734
    %v737 = vmul.f32 %v734, %v736
    %v738 = vsub.f32 1.0, %v737
    %v739 = vmul.f32 %v736, %v738
    %v740 = vadd.f32 %v736, %v739
    %vm741 = vweird.f32 %v734
    %vm742 = vweird.f32 %v736
    %vm743 = vmor %vm741, %vm742
    %v744 = vsel %vm743, %v736, %v740
    %v745 = vand.u32 2147483647, %v734
    %vm746 = vcmp.eq.f32.partialorder %v745, 8.507059e+37
    %v747 = vand.u32 %v734, 2147483648
    %v748 = vor.u32 1.1754944e-38, %v747
    %v749 = vsel %vm746, %v748, %v744
    %v750 = vmul.f32 1.0, %v749
    %v751 = vrcp.pop %v735
    %v752 = vmul.f32 %v735, %v751
    %v753 = vsub.f32 1.0, %v752
    %v754 = vmul.f32 %v751, %v753
    %v755 = vadd.f32 %v751, %v754
    %vm756 = vweird.f32 %v735
    %vm757 = vweird.f32 %v751
    %vm758 = vmor %vm756, %vm757
    %v759 = vsel %vm758, %v751, %v755
    %v760 = vand.u32 2147483647, %v735
    %vm761 = vcmp.eq.f32.partialorder %v760, 8.507059e+37
    %v762 = vand.u32 %v735, 2147483648
    %v763 = vor.u32 1.1754944e-38, %v762
    %v764 = vsel %vm761, %v763, %v759
    %v765 = vmul.f32 1.0, %v764
    %v766 = vxor.u32 %v684, 2147483648
    %v767 = vxor.u32 %v688, 2147483648
    %v768 = vmul.f32 %v766, 1.442695
    %v769 = vpow.pop %v768
    %v770 = vmul.f32 %v767, 1.442695
    %v771 = vpow.pop %v770
    %v772 = vadd.f32 %v769, 1.0
    %v773 = vadd.f32 %v771, 1.0
    %v774 = vrcp.pop %v772
    %v775 = vmul.f32 %v772, %v774
    %v776 = vsub.f32 1.0, %v775
    %v777 = vmul.f32 %v774, %v776
    %v778 = vadd.f32 %v774, %v777
    %vm779 = vweird.f32 %v772
    %vm780 = vweird.f32 %v774
    %vm781 = vmor %vm779, %vm780
    %v782 = vsel %vm781, %v774, %v778
    %v783 = vand.u32 2147483647, %v772
    %vm784 = vcmp.eq.f32.partialorder %v783, 8.507059e+37
    %v785 = vand.u32 %v772, 2147483648
    %v786 = vor.u32 1.1754944e-38, %v785
    %v787 = vsel %vm784, %v786, %v782
    %v788 = vmul.f32 1.0, %v787
    %v789 = vrcp.pop %v773
    %v790 = vmul.f32 %v773, %v789
    %v791 = vsub.f32 1.0, %v790
    %v792 = vmul.f32 %v789, %v791
    %v793 = vadd.f32 %v789, %v792
    %vm794 = vweird.f32 %v773
    %vm795 = vweird.f32 %v789
    %vm796 = vmor %vm794, %vm795
    %v797 = vsel %vm796, %v789, %v793
    %v798 = vand.u32 2147483647, %v773
    %vm799 = vcmp.eq.f32.partialorder %v798, 8.507059e+37
    %v800 = vand.u32 %v773, 2147483648
    %v801 = vor.u32 1.1754944e-38, %v800
    %v802 = vsel %vm799, %v801, %v797
    %v803 = vmul.f32 1.0, %v802
    %v804 = vtanh.pop %v685
    %v805 = vtanh.pop %v689
    %v806 = vld [vmem:[#allocation8] sm:$0xff]
    %v807 = vld [vmem:[#allocation8 + $0x8] sm:$0xff]
    %v808 = vmul.f32 %v712, %v806
    %v809 = vmul.f32 %v727, %v807
    %v810 = vmul.f32 %v750, %v804
    %v811 = vmul.f32 %v765, %v805
    %v812 = vadd.f32 %v808, %v810
    %v813 = vadd.f32 %v809, %v811
    %v814 = vtanh.pop %v812
    %v815 = vtanh.pop %v813
    %v816 = vmul.f32 %v814, %v788
    %v817 = vmul.f32 %v815, %v803
    %818 = vst [vmem:[#allocation14] sm:$0xff] %v812
    %819 = vst [vmem:[#allocation14 + $0x8] sm:$0xff] %v813
    %820 = vst [vmem:[#allocation15] sm:$0xff] %v816
    %821 = vst [vmem:[#allocation15 + $0x8] sm:$0xff] %v817
    // Predicated region
    $region62: #{lsthm_forward.1} parent=1 // pred_check
      _
    $region63: #{lsthm_forward.1} parent=1 // pred_check_branch
      %823 = sbr.rel (0) target = $region65
    $region64: #{lsthm_forward.1} parent=1 // pred_region
      %825 = vsyncadd [#allocation4], 0
      %s826 = sshll.u32 [#allocation14], 4
      %s827 = int_to_ptr.vmem [resolvable:$true] %s826
      %s828 = sshll.u32 %s8, 4
      %s829 = int_to_ptr.hbm [resolvable:$true] %s828
      %834 = dma.vmem_to_hbm [thread:$0]  %s827, 256, %s829, [#allocation4], 128, 128, 8
    $region65: #{lsthm_forward.1} parent=1 // pred_fallthru
      _
    // Predicated region
    $region66: #{lsthm_forward.1} parent=1 // pred_check
      _
    $region67: #{lsthm_forward.1} parent=1 // pred_check_branch
      %836 = sbr.rel (0) target = $region69
    $region68: #{lsthm_forward.1} parent=1 // pred_region
      %838 = vsyncadd [#allocation16], 0
      %s839 = sshll.u32 [#allocation15], 4
      %s840 = int_to_ptr.vmem [resolvable:$true] %s839
      %s841 = sshll.u32 %s9, 4
      %s842 = int_to_ptr.hbm [resolvable:$true] %s841
      %847 = dma.vmem_to_hbm [thread:$0]  %s840, 256, %s842, [#allocation16], 128, 128, 8
    $region69: #{lsthm_forward.1} parent=1 // pred_fallthru
      _
    // Predicated region
    $region70: #{lsthm_forward.1} parent=1 // pred_check
      _
    $region71: #{lsthm_forward.1} parent=1 // pred_check_branch
      %849 = sbr.rel (0) target = $region73
    $region72: #{lsthm_forward.1} parent=1 // pred_region
      %851 = dma.done [#allocation4], 256
    $region73: #{lsthm_forward.1} parent=1 // pred_fallthru
      _
    // Predicated region
    $region74: #{lsthm_forward.1} parent=1 // pred_check
      _
    $region75: #{lsthm_forward.1} parent=1 // pred_check_branch
      %853 = sbr.rel (0) target = $region77
    $region76: #{lsthm_forward.1} parent=1 // pred_region
      %855 = dma.done [#allocation16], 256
    $region77: #{lsthm_forward.1} parent=1 // pred_fallthru
      _
    %856 = vsyncpa [#allocation3], 1
    %857 = vsyncpa [#allocation6], 1
    %858 = vsyncpa [#allocation9], 1
    %859 = vsyncpa [#allocation12], 1
    %860 = vsyncpa [#allocation4], 1
    %861 = vsyncpa [#allocation16], 1

</llo_original>
